<compile_context>
chip_gen: v7x
topology: tpu7x:2x2x1
jax: 0.10.0
libtpu: 0.0.40
codegen_flags: <defaults>
</compile_context>

<pallas_src>
import functools

import jax
import jax.numpy as jnp
from jax.experimental import pallas as pl
from jax.experimental.pallas import tpu as pltpu


# Sentinel for padded mask positions: (1 - (-1e30)) * -1e4 ~= -1e34 (finite in
# f32) -> after the row-max subtraction exp() underflows to exactly 0, so padded
# keys drop out of the softmax bit-exactly regardless of the data / user mask.
_MASK_PAD = -1e30


# ----------------------------------------------------------------------------
# Helpers: padding / tile selection (generation-aware via VMEM capacity)
# ----------------------------------------------------------------------------
def _round_up(x, m):
    return ((x + m - 1) // m) * m


def _vmem_budget():
    """Returns (per-step tile-footprint budget, scoped-VMEM limit) in bytes."""
    try:
        cap = int(pltpu.get_tpu_info().vmem_capacity_bytes)
    except Exception:
        cap = 64 * 1024 * 1024  # assume the smallest generation (v7x) if query fails
    tile_budget = max(cap // 3, 8 * 1024 * 1024)
    vmem_limit = min((3 * cap) // 4, 96 * 1024 * 1024)
    return tile_budget, vmem_limit


def _block_footprint_bytes(bt, tq, kv, h, itemsize):
    # live blocks per grid step, x2 for input/output double buffering
    words = bt * (kv * h        # stationary sequence
                  + tq * h      # query tile
                  + kv + tq     # masks (approx)
                  + tq * h      # ctx output tile
                  + tq * kv)    # att output tile
    return 2 * words * itemsize


def _choose_query_tile(q_pad, kv_pad, h_pad, itemsize, budget, sublane, cap=512):
    cands = []
    if q_pad <= cap:
        cands.append(q_pad)
    t = cap
    while t >= sublane:
        if t < q_pad:
            cands.append(t)
        t //= 2
    for c in cands:
        if _block_footprint_bytes(1, c, kv_pad, h_pad, itemsize) <= budget:
            return c
    # TODO(synk): if even the minimum query tile does not fit (huge key_len *
    # hidden), a flash-style online softmax over key tiles would be required.
    return sublane


def _choose_batch_tile(batch, fits):
    for bt in (8, 4, 2, 1):
        if bt <= batch and batch % bt == 0 and fits(bt):
            return bt
    return 1


# ----------------------------------------------------------------------------
# Kernels
# ----------------------------------------------------------------------------
def _dec_dir_kernel(enc_ref, dec_ref, emask_ref, ctx_ref, att_ref, *, scale):
    """Softmax over encoder axis -> decoder_att (Bt,TD,E), decoder_ctx (Bt,TD,H)."""
    enc = enc_ref[...]                                     # (Bt, E, H)
    dec = dec_ref[...]                                     # (Bt, TD, H)
    # (1 - mask) * -1e4 broadcast over decoder rows; padded encoder positions
    # carry the large-negative sentinel -> their exp() is exactly 0.
    col_pen = (1.0 - emask_ref[...].astype(jnp.float32)) * -10000.0   # (Bt, 1, E)

    if scale:                                              # static compile-time branch
        dec = dec * jnp.asarray(scale, dec.dtype)          # fold scale into small operand

    # sim[b,d,e] = sum_h dec[b,d,h] * enc[b,e,h]  (no materialized transpose)
    sim = jnp.einsum("bdh,beh->bde", dec, enc,
                     preferred_element_type=jnp.float32)   # (Bt, TD, E)
    sim = sim + col_pen

    m = jnp.max(sim, axis=-1, keepdims=True)
    p = jnp.exp(sim - m)
    att = p * pl.reciprocal(jnp.sum(p, axis=-1, keepdims=True), approx=True)

    ctx = jnp.einsum("bde,beh->bdh", att.astype(enc.dtype), enc,
                     preferred_element_type=jnp.float32)   # (Bt, TD, H)

    ctx_ref[...] = ctx.astype(ctx_ref.dtype)
    att_ref[...] = att.astype(att_ref.dtype)


def _enc_dir_kernel(dec_ref, enc_ref, emask_ref, dmask_ref, ctx_ref, att_ref, *, scale):
    """Softmax over decoder axis -> encoder_att (Bt,TE,D), encoder_ctx (Bt,TE,H)."""
    dec = dec_ref[...]                                     # (Bt, D, H)
    enc = enc_ref[...]                                     # (Bt, TE, H)
    row_pen = (1.0 - emask_ref[...].astype(jnp.float32)) * -10000.0   # (Bt, TE, 1)
    col_pen = (1.0 - dmask_ref[...].astype(jnp.float32)) * -10000.0   # (Bt, 1, D)

    if scale:
        enc = enc * jnp.asarray(scale, enc.dtype)

    # Transposed similarity computed directly by contracting on H; matches
    # PyTorch's ((dec @ enc^T)*scale + enc_pen)^T + dec_pen ordering.
    sim_t = jnp.einsum("beh,bdh->bed", enc, dec,
                       preferred_element_type=jnp.float32)  # (Bt, TE, D)
    sim_t = sim_t + row_pen + col_pen

    m = jnp.max(sim_t, axis=-1, keepdims=True)
    p = jnp.exp(sim_t - m)
    att = p * pl.reciprocal(jnp.sum(p, axis=-1, keepdims=True), approx=True)

    ctx = jnp.einsum("bed,bdh->beh", att.astype(dec.dtype), dec,
                     preferred_element_type=jnp.float32)    # (Bt, TE, H)

    ctx_ref[...] = ctx.astype(ctx_ref.dtype)
    att_ref[...] = att.astype(att_ref.dtype)


# ----------------------------------------------------------------------------
# Wrapper
# ----------------------------------------------------------------------------
def dot_attention(encoder_seq, decoder_seq, encoder_mask=None, decoder_mask=None,
                  *, bidirectional=False, scale=None):
    """Pallas implementation of DotAttention.forward.

    encoder_seq : (B, E, H);  decoder_seq : (B, D, H)
    encoder_mask: (B, E) (1 = keep, 0 = mask) or None
    decoder_mask: (B, D) or None (only used when bidirectional=True)
    """
    B, E, H = encoder_seq.shape
    D = decoder_seq.shape[1]
    dtype = encoder_seq.dtype
    itemsize = jnp.dtype(dtype).itemsize
    sublane = 8 if itemsize >= 4 else (16 if itemsize == 2 else 32)
    scale = scale if scale else None        # match PyTorch's `if self.scale:` check

    tile_budget, vmem_limit = _vmem_budget()

    # ---- pad to lane (128) / sublane multiples: dense stores + full MXU tiles
    H_pad = _round_up(H, 128)
    E_pad = _round_up(E, 128)
    D_pad = _round_up(D, 128 if bidirectional else sublane)

    # ---- tile selection: decoder-query direction
    TD = _choose_query_tile(D_pad, E_pad, H_pad, itemsize, tile_budget, sublane)
    D_pad = _round_up(D_pad, TD)
    Bt_d = _choose_batch_tile(
        B, lambda bt: _block_footprint_bytes(bt, TD, E_pad, H_pad, itemsize) <= tile_budget)

    if bidirectional:
        # ---- tile selection: encoder-query direction
        TE = _choose_query_tile(E_pad, D_pad, H_pad, itemsize, tile_budget, sublane)
        E_pad = _round_up(E_pad, TE)
        Bt_e = _choose_batch_tile(
            B, lambda bt: _block_footprint_bytes(bt, TE, D_pad, H_pad, itemsize) <= tile_budget)

    # ---- pad operands / masks
    enc_p = jnp.pad(encoder_seq, ((0, 0), (0, E_pad - E), (0, H_pad - H)))
    dec_p = jnp.pad(decoder_seq, ((0, 0), (0, D_pad - D), (0, H_pad - H)))

    emask = (jnp.ones((B, E), jnp.float32) if encoder_mask is None
             else encoder_mask.astype(jnp.float32))
    emask = jnp.pad(emask, ((0, 0), (0, E_pad - E)), constant_values=_MASK_PAD)

    cparams = pltpu.CompilerParams(
        dimension_semantics=("parallel", "parallel"),
        vmem_limit_bytes=vmem_limit)

    # ---------------- decoder -> encoder direction (always computed) ----------
    dec_call = pl.pallas_call(
        functools.partial(_dec_dir_kernel, scale=scale),
        out_shape=(jax.ShapeDtypeStruct((B, D_pad, H_pad), dtype),
                   jax.ShapeDtypeStruct((B, D_pad, E_pad), dtype)),
        grid_spec=pltpu.PrefetchScalarGridSpec(
            num_scalar_prefetch=0,
            grid=(B // Bt_d, D_pad // TD),
            in_specs=[
                pl.BlockSpec((Bt_d, E_pad, H_pad), lambda b, d: (b, 0, 0)),  # encoder (stationary)
                pl.BlockSpec((Bt_d, TD, H_pad), lambda b, d: (b, d, 0)),     # decoder tile
                pl.BlockSpec((Bt_d, 1, E_pad), lambda b, d: (b, 0, 0)),      # encoder mask
            ],
            out_specs=[
                pl.BlockSpec((Bt_d, TD, H_pad), lambda b, d: (b, d, 0)),     # decoder ctx
                pl.BlockSpec((Bt_d, TD, E_pad), lambda b, d: (b, d, 0)),     # decoder att
            ]),
        compiler_params=cparams,
        cost_estimate=pl.CostEstimate(
            flops=4 * B * D_pad * E_pad * H_pad,
            transcendentals=B * D_pad * E_pad,
            bytes_accessed=itemsize * B * (E_pad * H_pad + 2 * D_pad * H_pad
                                           + D_pad * E_pad) + 4 * B * E_pad),
    )
    dec_ctx_p, dec_att_p = dec_call(enc_p, dec_p, emask[:, None, :])
    dec_ctx = dec_ctx_p[:, :D, :H]
    dec_att = dec_att_p[:, :D, :E]

    if not bidirectional:
        return dec_ctx, dec_att

    # ---------------- encoder -> decoder direction (bidirectional only) -------
    dmask = (jnp.ones((B, D), jnp.float32) if decoder_mask is None
             else decoder_mask.astype(jnp.float32))
    dmask = jnp.pad(dmask, ((0, 0), (0, D_pad - D)), constant_values=_MASK_PAD)

    enc_call = pl.pallas_call(
        functools.partial(_enc_dir_kernel, scale=scale),
        out_shape=(jax.ShapeDtypeStruct((B, E_pad, H_pad), dtype),
                   jax.ShapeDtypeStruct((B, E_pad, D_pad), dtype)),
        grid_spec=pltpu.PrefetchScalarGridSpec(
            num_scalar_prefetch=0,
            grid=(B // Bt_e, E_pad // TE),
            in_specs=[
                pl.BlockSpec((Bt_e, D_pad, H_pad), lambda b, e: (b, 0, 0)),  # decoder (stationary)
                pl.BlockSpec((Bt_e, TE, H_pad), lambda b, e: (b, e, 0)),     # encoder tile
                pl.BlockSpec((Bt_e, TE, 1), lambda b, e: (b, e, 0)),         # encoder mask (rows)
                pl.BlockSpec((Bt_e, 1, D_pad), lambda b, e: (b, 0, 0)),      # decoder mask (cols)
            ],
            out_specs=[
                pl.BlockSpec((Bt_e, TE, H_pad), lambda b, e: (b, e, 0)),     # encoder ctx
                pl.BlockSpec((Bt_e, TE, D_pad), lambda b, e: (b, e, 0)),     # encoder att
            ]),
        compiler_params=cparams,
        cost_estimate=pl.CostEstimate(
            flops=4 * B * D_pad * E_pad * H_pad,
            transcendentals=B * D_pad * E_pad,
            bytes_accessed=itemsize * B * (2 * E_pad * H_pad + D_pad * H_pad
                                           + E_pad * D_pad) + 4 * B * (E_pad + D_pad)),
    )
    enc_ctx_p, enc_att_p = enc_call(dec_p, enc_p, emask[:, :, None], dmask[:, None, :])
    enc_ctx = enc_ctx_p[:, :E, :H]
    enc_att = enc_att_p[:, :E, :D]
    return enc_ctx, dec_ctx, enc_att, dec_att


# ----------------------------------------------------------------------------
# Pure-JAX reference (mirrors the PyTorch module exactly)
# ----------------------------------------------------------------------------
def dot_attention_ref(encoder_seq, decoder_seq, encoder_mask=None,
                      decoder_mask=None, *, bidirectional=False, scale=None):
    hp = jax.lax.Precision.HIGHEST
    sim = jnp.einsum("bdh,beh->bde", decoder_seq, encoder_seq, precision=hp)
    if scale:
        sim = sim * scale
    if encoder_mask is not None:
        sim = sim + (1.0 - encoder_mask[:, None, :]) * -10000.0
    dec_att = jax.nn.softmax(sim, axis=-1)
    dec_ctx = jnp.einsum("bde,beh->bdh", dec_att, encoder_seq, precision=hp)
    if bidirectional:
        sim_t = jnp.swapaxes(sim, 1, 2)
        if decoder_mask is not None:
            sim_t = sim_t + (1.0 - decoder_mask[:, None, :]) * -10000.0
        enc_att = jax.nn.softmax(sim_t, axis=-1)
        enc_ctx = jnp.einsum("bed,bdh->beh", enc_att, decoder_seq, precision=hp)
        return enc_ctx, dec_ctx, enc_att, dec_att
    return dec_ctx, dec_att


# ----------------------------------------------------------------------------
if __name__ == "__main__":
    key = jax.random.PRNGKey(0)
    k1, k2, k3, k4 = jax.random.split(key, 4)

    B, E, D, H = 2, 16, 8, 32
    encoder_seq = jax.random.normal(k1, (B, E, H), dtype=jnp.float32)
    decoder_seq = jax.random.normal(k2, (B, D, H), dtype=jnp.float32)
    encoder_mask = (jax.random.uniform(k3, (B, E)) > 0.25).astype(jnp.float32)
    decoder_mask = (jax.random.uniform(k4, (B, D)) > 0.25).astype(jnp.float32)
    scale = 1.0 / (H ** 0.5)

    # approx EUP reciprocal in the kernel softmax -> slightly looser tolerance
    tol = dict(atol=5e-3, rtol=5e-3)

    # --- non-bidirectional ---------------------------------------------------
    dec_ctx, dec_att = jax.block_until_ready(
        dot_attention(encoder_seq, decoder_seq, encoder_mask,
                      bidirectional=False, scale=scale))
    dec_ctx_r, dec_att_r = dot_attention_ref(
        encoder_seq, decoder_seq, encoder_mask, bidirectional=False, scale=scale)
    assert dec_ctx.shape == (B, D, H) and dec_att.shape == (B, D, E)
    assert jnp.allclose(dec_ctx, dec_ctx_r, **tol)
    assert jnp.allclose(dec_att, dec_att_r, **tol)

    # --- non-bidirectional, no masks / no scale ------------------------------
    out_nm = jax.block_until_ready(
        dot_attention(encoder_seq, decoder_seq, None, None,
                      bidirectional=False, scale=None))
    ref_nm = dot_attention_ref(encoder_seq, decoder_seq, None, None,
                               bidirectional=False, scale=None)
    for o, r in zip(out_nm, ref_nm):
        assert jnp.allclose(o, r, **tol)

    # --- bidirectional --------------------------------------------------------
    outs = jax.block_until_ready(
        dot_attention(encoder_seq, decoder_seq, encoder_mask, decoder_mask,
                      bidirectional=True, scale=scale))
    refs = dot_attention_ref(encoder_seq, decoder_seq, encoder_mask, decoder_mask,
                             bidirectional=True, scale=scale)
    assert outs[0].shape == (B, E, H) and outs[2].shape == (B, E, D)
    for o, r in zip(outs, refs):
        assert jnp.allclose(o, r, **tol)

    print("KERNEL_OK")
</pallas_src>

<mosaic_0001>
module attributes {stable_mosaic.version = 11 : i64} {
  func.func @_dec_dir_kernel(%arg0: i32, %arg1: i32, %arg2: memref<2x128x128xf32, #tpu.memory_space<vmem>>, %arg3: memref<2x8x128xf32, #tpu.memory_space<vmem>>, %arg4: memref<2x1x128xf32, #tpu.memory_space<vmem>>, %arg5: memref<2x8x128xf32, #tpu.memory_space<vmem>>, %arg6: memref<2x8x128xf32, #tpu.memory_space<vmem>>) attributes {dimension_semantics = [#tpu.dimension_semantics<parallel>, #tpu.dimension_semantics<parallel>], iteration_bounds = array<i64: 1, 1>, scalar_prefetch = 0 : i64, scratch_operands = 0 : i64, tpu.core_type = #tpu.core_type<tc>, window_params = [{transform_indices = @transform_0, window_bounds = array<i64: 2, 128, 128>}, {transform_indices = @transform_1, window_bounds = array<i64: 2, 8, 128>}, {transform_indices = @transform_2, window_bounds = array<i64: 2, 1, 128>}, {transform_indices = @transform_3, window_bounds = array<i64: 2, 8, 128>}, {transform_indices = @transform_4, window_bounds = array<i64: 2, 8, 128>}]} {
    %c0 = arith.constant 0 : index
    %c0_0 = arith.constant 0 : index
    %c0_1 = arith.constant 0 : index
    %0 = vector.load %arg2[%c0, %c0_0, %c0_1] : memref<2x128x128xf32, #tpu.memory_space<vmem>>, vector<2x128x128xf32>
    %c0_2 = arith.constant 0 : index
    %c0_3 = arith.constant 0 : index
    %c0_4 = arith.constant 0 : index
    %1 = vector.load %arg3[%c0_2, %c0_3, %c0_4] : memref<2x8x128xf32, #tpu.memory_space<vmem>>, vector<2x8x128xf32>
    %c0_5 = arith.constant 0 : index
    %c0_6 = arith.constant 0 : index
    %c0_7 = arith.constant 0 : index
    %2 = vector.load %arg4[%c0_5, %c0_6, %c0_7] : memref<2x1x128xf32, #tpu.memory_space<vmem>>, vector<2x1x128xf32>
    %cst = arith.constant 1.000000e+00 : f32
    %3 = vector.broadcast %cst : f32 to vector<2x1x128xf32>
    %4 = arith.subf %3, %2 : vector<2x1x128xf32>
    %cst_8 = arith.constant -1.000000e+04 : f32
    %5 = vector.broadcast %cst_8 : f32 to vector<2x1x128xf32>
    %6 = arith.mulf %4, %5 : vector<2x1x128xf32>
    %cst_9 = arith.constant 0.176776692 : f32
    %7 = vector.broadcast %cst_9 : f32 to vector<2x8x128xf32>
    %8 = arith.mulf %1, %7 : vector<2x8x128xf32>
    "tpu.trace_start"() <{level = 10 : i32, message = "bdh,beh->bde"}> : () -> ()
    %cst_10 = arith.constant dense<0.000000e+00> : vector<2x8x128xf32>
    %9 = tpu.matmul %8, %0, %cst_10 {dimension_numbers = #tpu.dot_dimension_numbers<[2], [2], [1], [1], [0, 0, 0, 1, 1, 1], [0], [0]>} : vector<2x8x128xf32>, vector<2x128x128xf32>, vector<2x8x128xf32> -> vector<2x8x128xf32>
    "tpu.trace_stop"() : () -> ()
    %10 = vector.broadcast %6 : vector<2x1x128xf32> to vector<2x8x128xf32>
    %11 = arith.addf %9, %10 : vector<2x8x128xf32>
    %cst_11 = arith.constant dense<0xFF800000> : vector<2x8xf32>
    %12 = vector.multi_reduction <maximumf>, %11, %cst_11 [2] : vector<2x8x128xf32> to vector<2x8xf32>
    %13 = vector.shape_cast %12 : vector<2x8xf32> to vector<2x8x1xf32>
    %14 = vector.broadcast %13 : vector<2x8x1xf32> to vector<2x8x128xf32>
    %15 = arith.subf %11, %14 : vector<2x8x128xf32>
    %16 = math.exp %15 : vector<2x8x128xf32>
    %cst_12 = arith.constant dense<0.000000e+00> : vector<2x8xf32>
    %17 = vector.multi_reduction <add>, %16, %cst_12 [2] : vector<2x8x128xf32> to vector<2x8xf32>
    %18 = vector.shape_cast %17 : vector<2x8xf32> to vector<2x8x1xf32>
    %19 = tpu.reciprocal %18 {approx = true} : vector<2x8x1xf32> -> vector<2x8x1xf32>
    %20 = vector.broadcast %19 : vector<2x8x1xf32> to vector<2x8x128xf32>
    %21 = arith.mulf %16, %20 : vector<2x8x128xf32>
    "tpu.trace_start"() <{level = 10 : i32, message = "bde,beh->bdh"}> : () -> ()
    %cst_13 = arith.constant dense<0.000000e+00> : vector<2x8x128xf32>
    %22 = tpu.matmul %21, %0, %cst_13 {dimension_numbers = #tpu.dot_dimension_numbers<[2], [1], [1], [2], [0, 0, 0, 1, 1, 2], [0], [0]>} : vector<2x8x128xf32>, vector<2x128x128xf32>, vector<2x8x128xf32> -> vector<2x8x128xf32>
    "tpu.trace_stop"() : () -> ()
    %c0_14 = arith.constant 0 : index
    %c0_15 = arith.constant 0 : index
    %c0_16 = arith.constant 0 : index
    %23 = vector.load %arg5[%c0_14, %c0_15, %c0_16] : memref<2x8x128xf32, #tpu.memory_space<vmem>>, vector<2x8x128xf32>
    tpu.vector_store %arg5[%c0_14, %c0_15, %c0_16], %22 {strides = array<i32>} : memref<2x8x128xf32, #tpu.memory_space<vmem>>, vector<2x8x128xf32>,
    %c0_17 = arith.constant 0 : index
    %c0_18 = arith.constant 0 : index
    %c0_19 = arith.constant 0 : index
    %24 = vector.load %arg6[%c0_17, %c0_18, %c0_19] : memref<2x8x128xf32, #tpu.memory_space<vmem>>, vector<2x8x128xf32>
    tpu.vector_store %arg6[%c0_17, %c0_18, %c0_19], %21 {strides = array<i32>} : memref<2x8x128xf32, #tpu.memory_space<vmem>>, vector<2x8x128xf32>,
    return
  }
  func.func @transform_0(%arg0: i32, %arg1: i32) -> (i32, i32, i32) {
    %c0_i32 = arith.constant 0 : i32
    %c0_i32_0 = arith.constant 0 : i32
    %c0_i32_1 = arith.constant 0 : i32
    return %arg0, %c0_i32, %c0_i32_0 : i32, i32, i32
  }
  func.func @transform_1(%arg0: i32, %arg1: i32) -> (i32, i32, i32) {
    %c0_i32 = arith.constant 0 : i32
    %c0_i32_0 = arith.constant 0 : i32
    return %arg0, %arg1, %c0_i32 : i32, i32, i32
  }
  func.func @transform_2(%arg0: i32, %arg1: i32) -> (i32, i32, i32) {
    %c0_i32 = arith.constant 0 : i32
    %c0_i32_0 = arith.constant 0 : i32
    %c0_i32_1 = arith.constant 0 : i32
    return %arg0, %c0_i32, %c0_i32_0 : i32, i32, i32
  }
  func.func @transform_3(%arg0: i32, %arg1: i32) -> (i32, i32, i32) {
    %c0_i32 = arith.constant 0 : i32
    %c0_i32_0 = arith.constant 0 : i32
    return %arg0, %arg1, %c0_i32 : i32, i32, i32
  }
  func.func @transform_4(%arg0: i32, %arg1: i32) -> (i32, i32, i32) {
    %c0_i32 = arith.constant 0 : i32
    %c0_i32_0 = arith.constant 0 : i32
    return %arg0, %arg1, %c0_i32 : i32, i32, i32
  }
}

</mosaic_0001>

<llo_original>
// kernel: tpu_custom_call.1
$region0: #{tpu_custom_call.1}
  #allocation0 [shape = 'u32[]', space=smem, size = 0x4, offset = 0x4, fixed_abs, tag = 'smem constant byte address 0x4 - core index']
  #allocation1 [shape = 'u32[144,128]{1,0:T(1,128)}', space=vmem, size = 0x12000, scoped, tag = 'internal scratch']
  %s0 = inlined_call_operand.hbm [shape: f32[2,128,128], index: 0, kind: input, shape index: {}]
  %s1 = inlined_call_operand.hbm [shape: f32[2,8,128], index: 1, kind: input, shape index: {}]
  %s2 = inlined_call_operand.vmem [shape: f32[2,1,128], index: 2, kind: input, shape index: {}]
  %s3 = inlined_call_operand.hbm [shape: f32[2,8,128], index: 3, kind: output, shape index: {0}]
  %s4 = inlined_call_operand.hbm [shape: f32[2,8,128], index: 4, kind: output, shape index: {1}]
  %5 = xla_tuple %s3, %s4
  %s6 = sld [smem:[#allocation0]]
  $region38: #{tpu_custom_call.1} parent=0
    _
  %s8 = ssub.s32 1, %s6
  %s9 = scalar_select 0, %s8, %s6
  $region1: #{tpu_custom_call.1} parent=0
    #allocation2 [shape = 'u8[131072]{0}', space=vmem, size = 0x20000, scoped, tag = 'input window, operand 0, single buffered']
    #allocation3 [shape = 's32[1]{0}', space=sflag, size = 0x4, scoped, tag = 'scoped memory for tpu_custom_call.1']
    #allocation4 [shape = 's32[1]{0}', space=sflag, size = 0x4, scoped, tag = 'scoped memory for tpu_custom_call.1']
    #allocation5 [shape = 'u8[8192]{0}', space=vmem, size = 0x2000, scoped, tag = 'input window, operand 1, single buffered']
    #allocation6 [shape = 's32[1]{0}', space=sflag, size = 0x4, scoped, tag = 'scoped memory for tpu_custom_call.1']
    #allocation7 [shape = 'u8[8192]{0}', space=vmem, size = 0x2000, scoped, tag = 'output window, operand 0, single buffered']
    #allocation8 [shape = 'u8[8192]{0}', space=vmem, size = 0x2000, scoped, tag = 'output window, operand 1, single buffered']
    #allocation9 [shape = 's32[1]{0}', space=sflag, size = 0x4, scoped, tag = 'scoped memory for tpu_custom_call.1']
    %10 = vsyncpa [#allocation3], 0
    %11 = vsyncpa [#allocation6], 0
    %12 = vsyncpa [#allocation4], 0
    %13 = vsyncpa [#allocation9], 0
    // Predicated region
    $region2: #{tpu_custom_call.1} parent=1 // pred_check
      _
    $region3: #{tpu_custom_call.1} parent=1 // pred_check_branch
      %15 = sbr.rel (0) target = $region5
    $region4: #{tpu_custom_call.1} parent=1 // pred_region
      %s17 = ssub.s32 4096, 4096
      %18 = vsyncadd [#allocation3], %s17
      %s19 = sshll.u32 [#allocation2], 4
      %s20 = int_to_ptr.vmem [resolvable:$true] %s19
      %25 = dma.hbm_to_vmem [thread:$0]  %s0, 4096, %s20, [#allocation3], 128, 128, 8
    $region5: #{tpu_custom_call.1} parent=1 // pred_fallthru
      _
    // Predicated region
    $region6: #{tpu_custom_call.1} parent=1 // pred_check
      _
    $region7: #{tpu_custom_call.1} parent=1 // pred_check_branch
      %27 = sbr.rel (0) target = $region9
    $region8: #{tpu_custom_call.1} parent=1 // pred_region
      %s29 = ssub.s32 256, 256
      %30 = vsyncadd [#allocation6], %s29
      %s31 = sshll.u32 [#allocation5], 4
      %s32 = int_to_ptr.vmem [resolvable:$true] %s31
      %37 = dma.hbm_to_vmem [thread:$0]  %s1, 256, %s32, [#allocation6], 128, 128, 8
    $region9: #{tpu_custom_call.1} parent=1 // pred_fallthru
      _
    // Predicated region
    $region10: #{tpu_custom_call.1} parent=1 // pred_check
      _
    $region11: #{tpu_custom_call.1} parent=1 // pred_check_branch
      %39 = sbr.rel (0) target = $region13
    $region12: #{tpu_custom_call.1} parent=1 // pred_region
      _
    $region13: #{tpu_custom_call.1} parent=1 // pred_fallthru
      _
    // Predicated region
    $region14: #{tpu_custom_call.1} parent=1 // pred_check
      _
    $region15: #{tpu_custom_call.1} parent=1 // pred_check_branch
      %41 = sbr.rel (0) target = $region17
    $region16: #{tpu_custom_call.1} parent=1 // pred_region
      %42 = dma.done [#allocation3], 4096
    $region17: #{tpu_custom_call.1} parent=1 // pred_fallthru
      _
    // Predicated region
    $region18: #{tpu_custom_call.1} parent=1 // pred_check
      _
    $region19: #{tpu_custom_call.1} parent=1 // pred_check_branch
      %44 = sbr.rel (0) target = $region21
    $region20: #{tpu_custom_call.1} parent=1 // pred_region
      %45 = dma.done [#allocation6], 256
    $region21: #{tpu_custom_call.1} parent=1 // pred_fallthru
      _
    %v46 = vld [vmem:[#allocation2] sm:$0xff]
    %v47 = vld [vmem:[#allocation2 + $0x8] sm:$0xff]
    %v48 = vld [vmem:[#allocation2 + $0x10] sm:$0xff]
    %v49 = vld [vmem:[#allocation2 + $0x18] sm:$0xff]
    %v50 = vld [vmem:[#allocation2 + $0x20] sm:$0xff]
    %v51 = vld [vmem:[#allocation2 + $0x28] sm:$0xff]
    %v52 = vld [vmem:[#allocation2 + $0x30] sm:$0xff]
    %v53 = vld [vmem:[#allocation2 + $0x38] sm:$0xff]
    %v54 = vld [vmem:[#allocation2 + $0x40] sm:$0xff]
    %v55 = vld [vmem:[#allocation2 + $0x48] sm:$0xff]
    %v56 = vld [vmem:[#allocation2 + $0x50] sm:$0xff]
    %v57 = vld [vmem:[#allocation2 + $0x58] sm:$0xff]
    %v58 = vld [vmem:[#allocation2 + $0x60] sm:$0xff]
    %v59 = vld [vmem:[#allocation2 + $0x68] sm:$0xff]
    %v60 = vld [vmem:[#allocation2 + $0x70] sm:$0xff]
    %v61 = vld [vmem:[#allocation2 + $0x78] sm:$0xff]
    %v62 = vld [vmem:[#allocation2 + $0x80] sm:$0xff]
    %v63 = vld [vmem:[#allocation2 + $0x88] sm:$0xff]
    %v64 = vld [vmem:[#allocation2 + $0x90] sm:$0xff]
    %v65 = vld [vmem:[#allocation2 + $0x98] sm:$0xff]
    %v66 = vld [vmem:[#allocation2 + $0xa0] sm:$0xff]
    %v67 = vld [vmem:[#allocation2 + $0xa8] sm:$0xff]
    %v68 = vld [vmem:[#allocation2 + $0xb0] sm:$0xff]
    %v69 = vld [vmem:[#allocation2 + $0xb8] sm:$0xff]
    %v70 = vld [vmem:[#allocation2 + $0xc0] sm:$0xff]
    %v71 = vld [vmem:[#allocation2 + $0xc8] sm:$0xff]
    %v72 = vld [vmem:[#allocation2 + $0xd0] sm:$0xff]
    %v73 = vld [vmem:[#allocation2 + $0xd8] sm:$0xff]
    %v74 = vld [vmem:[#allocation2 + $0xe0] sm:$0xff]
    %v75 = vld [vmem:[#allocation2 + $0xe8] sm:$0xff]
    %v76 = vld [vmem:[#allocation2 + $0xf0] sm:$0xff]
    %v77 = vld [vmem:[#allocation2 + $0xf8] sm:$0xff]
    %v78 = vld [vmem:[#allocation5] sm:$0xff]
    %v79 = vld [vmem:[#allocation5 + $0x8] sm:$0xff]
    %v80 = vld [vmem:[%s2] sm:$0x1]
    %v81 = vld [vmem:[%s2 + $0x1] sm:$0x1]
    %v82 = vsub.f32 1.0, %v80
    %v83 = vsub.f32 1.0, %v81
    %v84 = vmul.f32 %v82, -10000.0
    %v85 = vmul.f32 %v83, -10000.0
    %v86 = vmul.f32 %v78, 0.17677669
    %v87 = vmul.f32 %v79, 0.17677669
    %v90 = vlaneseq
    %v91 = vshrl.u32 %v90, 7
    %v92 = vsub.s32 0, %v91
    %v93 = vrot.slane %v84, %v92
    %v94 = vlaneseq
    %v95 = vshrl.u32 %v94, 7
    %v96 = vsub.s32 0, %v95
    %v97 = vrot.slane %v85, %v96
    %100 = vmatprep.subr.mxu0 0.0
    %101 = vmatpush1.xpose.msra.mxu0 %v46
    %102 = vmatprep.subr.mxu0 0.0
    %103 = vmatpush1.xpose.msra.mxu0 %v47
    %104 = vmatprep.subr.mxu0 0.0
    %105 = vmatpush1.xpose.msra.mxu0 %v48
    %106 = vmatprep.subr.mxu0 0.0
    %107 = vmatpush1.xpose.msra.mxu0 %v49
    %108 = vmatprep.subr.mxu0 0.0
    %109 = vmatpush1.xpose.msra.mxu0 %v50
    %110 = vmatprep.subr.mxu0 0.0
    %111 = vmatpush1.xpose.msra.mxu0 %v51
    %112 = vmatprep.subr.mxu0 0.0
    %113 = vmatpush1.xpose.msra.mxu0 %v52
    %114 = vmatprep.subr.mxu0 0.0
    %115 = vmatpush1.xpose.msra.mxu0 %v53
    %116 = vmatprep.subr.mxu0 0.0
    %117 = vmatpush1.xpose.msra.mxu0 %v54
    %118 = vmatprep.subr.mxu0 0.0
    %119 = vmatpush1.xpose.msra.mxu0 %v55
    %120 = vmatprep.subr.mxu0 0.0
    %121 = vmatpush1.xpose.msra.mxu0 %v56
    %122 = vmatprep.subr.mxu0 0.0
    %123 = vmatpush1.xpose.msra.mxu0 %v57
    %124 = vmatprep.subr.mxu0 0.0
    %125 = vmatpush1.xpose.msra.mxu0 %v58
    %126 = vmatprep.subr.mxu0 0.0
    %127 = vmatpush1.xpose.msra.mxu0 %v59
    %128 = vmatprep.subr.mxu0 0.0
    %129 = vmatpush1.xpose.msra.mxu0 %v60
    %130 = vmatprep.subr.mxu0 0.0
    %131 = vmatpush1.xpose.msra.mxu0 %v61
    %132 = vmatprep.subr.mxu0 0.0
    %133 = vmatpush1.xpose.msra.mxu0 0.0
    %134 = vmatprep.subr.mxu0 0.0
    %135 = vmatpush1.xpose.msra.mxu0 0.0
    %136 = vmatprep.subr.mxu0 0.0
    %137 = vmatpush1.xpose.msra.mxu0 0.0
    %138 = vmatprep.subr.mxu0 0.0
    %139 = vmatpush1.xpose.msra.mxu0 0.0
    %140 = vmatprep.subr.mxu0 0.0
    %141 = vmatpush1.xpose.msra.mxu0 0.0
    %142 = vmatprep.subr.mxu0 0.0
    %143 = vmatpush1.xpose.msra.mxu0 0.0
    %144 = vmatprep.subr.mxu0 0.0
    %145 = vmatpush1.xpose.msra.mxu0 0.0
    %146 = vmatprep.subr.mxu0 0.0
    %147 = vmatpush1.xpose.msra.mxu0 0.0
    %148 = vmatprep.subr.mxu0 0.0
    %149 = vmatpush1.xpose.msra.mxu0 0.0
    %150 = vmatprep.subr.mxu0 0.0
    %151 = vmatpush1.xpose.msra.mxu0 0.0
    %152 = vmatprep.subr.mxu0 0.0
    %153 = vmatpush1.xpose.msra.mxu0 0.0
    %154 = vmatprep.subr.mxu0 0.0
    %155 = vmatpush1.xpose.msra.mxu0 0.0
    %156 = vmatprep.subr.mxu0 0.0
    %157 = vmatpush1.xpose.msra.mxu0 0.0
    %158 = vmatprep.subr.mxu0 0.0
    %159 = vmatpush1.xpose.msra.mxu0 0.0
    %160 = vmatprep.subr.mxu0 0.0
    %161 = vmatpush1.xpose.msra.mxu0 0.0
    %162 = vmatprep.subr.mxu0 0.0
    %163 = vmatpush1.xpose.msra.mxu0 0.0
    %164 = vmatprep.mubr.f32.mxu0 0.0
    %165 = vmatmul.mubr.f32.gmra.mrb[0].mxu0 %v86
    %v166 = vpop.f32.mrb[0].mxu0
    %v167 = vadd.f32 %v93, %v166
    %v168 = vpop.f32.mrb[0].mxu0
    %169 = vdwg.mxu0
    %170 = vmatprep.subr.mxu0 0.0
    %171 = vmatpush1.xpose.msra.mxu0 %v62
    %172 = vmatprep.subr.mxu0 0.0
    %173 = vmatpush1.xpose.msra.mxu0 %v63
    %174 = vmatprep.subr.mxu0 0.0
    %175 = vmatpush1.xpose.msra.mxu0 %v64
    %176 = vmatprep.subr.mxu0 0.0
    %177 = vmatpush1.xpose.msra.mxu0 %v65
    %178 = vmatprep.subr.mxu0 0.0
    %179 = vmatpush1.xpose.msra.mxu0 %v66
    %180 = vmatprep.subr.mxu0 0.0
    %181 = vmatpush1.xpose.msra.mxu0 %v67
    %182 = vmatprep.subr.mxu0 0.0
    %183 = vmatpush1.xpose.msra.mxu0 %v68
    %184 = vmatprep.subr.mxu0 0.0
    %185 = vmatpush1.xpose.msra.mxu0 %v69
    %186 = vmatprep.subr.mxu0 0.0
    %187 = vmatpush1.xpose.msra.mxu0 %v70
    %188 = vmatprep.subr.mxu0 0.0
    %189 = vmatpush1.xpose.msra.mxu0 %v71
    %190 = vmatprep.subr.mxu0 0.0
    %191 = vmatpush1.xpose.msra.mxu0 %v72
    %192 = vmatprep.subr.mxu0 0.0
    %193 = vmatpush1.xpose.msra.mxu0 %v73
    %194 = vmatprep.subr.mxu0 0.0
    %195 = vmatpush1.xpose.msra.mxu0 %v74
    %196 = vmatprep.subr.mxu0 0.0
    %197 = vmatpush1.xpose.msra.mxu0 %v75
    %198 = vmatprep.subr.mxu0 0.0
    %199 = vmatpush1.xpose.msra.mxu0 %v76
    %200 = vmatprep.subr.mxu0 0.0
    %201 = vmatpush1.xpose.msra.mxu0 %v77
    %202 = vmatprep.subr.mxu0 0.0
    %203 = vmatpush1.xpose.msra.mxu0 0.0
    %204 = vmatprep.subr.mxu0 0.0
    %205 = vmatpush1.xpose.msra.mxu0 0.0
    %206 = vmatprep.subr.mxu0 0.0
    %207 = vmatpush1.xpose.msra.mxu0 0.0
    %208 = vmatprep.subr.mxu0 0.0
    %209 = vmatpush1.xpose.msra.mxu0 0.0
    %210 = vmatprep.subr.mxu0 0.0
    %211 = vmatpush1.xpose.msra.mxu0 0.0
    %212 = vmatprep.subr.mxu0 0.0
    %213 = vmatpush1.xpose.msra.mxu0 0.0
    %214 = vmatprep.subr.mxu0 0.0
    %215 = vmatpush1.xpose.msra.mxu0 0.0
    %216 = vmatprep.subr.mxu0 0.0
    %217 = vmatpush1.xpose.msra.mxu0 0.0
    %218 = vmatprep.subr.mxu0 0.0
    %219 = vmatpush1.xpose.msra.mxu0 0.0
    %220 = vmatprep.subr.mxu0 0.0
    %221 = vmatpush1.xpose.msra.mxu0 0.0
    %222 = vmatprep.subr.mxu0 0.0
    %223 = vmatpush1.xpose.msra.mxu0 0.0
    %224 = vmatprep.subr.mxu0 0.0
    %225 = vmatpush1.xpose.msra.mxu0 0.0
    %226 = vmatprep.subr.mxu0 0.0
    %227 = vmatpush1.xpose.msra.mxu0 0.0
    %228 = vmatprep.subr.mxu0 0.0
    %229 = vmatpush1.xpose.msra.mxu0 0.0
    %230 = vmatprep.subr.mxu0 0.0
    %231 = vmatpush1.xpose.msra.mxu0 0.0
    %232 = vmatprep.subr.mxu0 0.0
    %233 = vmatpush1.xpose.msra.mxu0 0.0
    %234 = vmatprep.mubr.f32.mxu0 0.0
    %235 = vmatmul.mubr.f32.gmra.mrb[0].mxu0 %v87
    %v236 = vpop.f32.mrb[0].mxu0
    %v237 = vadd.f32 %v97, %v236
    %v238 = vpop.f32.mrb[0].mxu0
    %239 = vdwg.mxu0
    %240 = vmax.xlane.f32.xlu0 %v167
    %v241 = vpop.xlane.xlu0 %240
    %242 = vmax.xlane.f32.xlu0 %v237
    %v243 = vpop.xlane.xlu0 %242
    %v244 = vsub.f32 %v167, %v241
    %v245 = vsub.f32 %v237, %v243
    %v246 = vmul.f32 %v244, 1.442695
    %v247 = vpow.pop %v246
    %v248 = vmul.f32 %v245, 1.442695
    %v249 = vpow.pop %v248
    %250 = vadd.xlane.f32.xlu0 %v247
    %v251 = vpop.xlane.xlu0 %250
    %252 = vadd.xlane.f32.xlu0 %v249
    %v253 = vpop.xlane.xlu0 %252
    %v254 = vrcp.pop %v251
    %v255 = vrcp.pop %v253
    %v256 = vmul.f32 %v247, %v254
    %v257 = vmul.f32 %v249, %v255
    %258 = vmatprep.subr.mxu0 0.0
    %259 = vmatpush1.msra.mxu0 %v46
    %260 = vmatprep.subr.mxu0 0.0
    %261 = vmatpush1.msra.mxu0 %v47
    %262 = vmatprep.subr.mxu0 0.0
    %263 = vmatpush1.msra.mxu0 %v48
    %264 = vmatprep.subr.mxu0 0.0
    %265 = vmatpush1.msra.mxu0 %v49
    %266 = vmatprep.subr.mxu0 0.0
    %267 = vmatpush1.msra.mxu0 %v50
    %268 = vmatprep.subr.mxu0 0.0
    %269 = vmatpush1.msra.mxu0 %v51
    %270 = vmatprep.subr.mxu0 0.0
    %271 = vmatpush1.msra.mxu0 %v52
    %272 = vmatprep.subr.mxu0 0.0
    %273 = vmatpush1.msra.mxu0 %v53
    %274 = vmatprep.subr.mxu0 0.0
    %275 = vmatpush1.msra.mxu0 %v54
    %276 = vmatprep.subr.mxu0 0.0
    %277 = vmatpush1.msra.mxu0 %v55
    %278 = vmatprep.subr.mxu0 0.0
    %279 = vmatpush1.msra.mxu0 %v56
    %280 = vmatprep.subr.mxu0 0.0
    %281 = vmatpush1.msra.mxu0 %v57
    %282 = vmatprep.subr.mxu0 0.0
    %283 = vmatpush1.msra.mxu0 %v58
    %284 = vmatprep.subr.mxu0 0.0
    %285 = vmatpush1.msra.mxu0 %v59
    %286 = vmatprep.subr.mxu0 0.0
    %287 = vmatpush1.msra.mxu0 %v60
    %288 = vmatprep.subr.mxu0 0.0
    %289 = vmatpush1.msra.mxu0 %v61
    %290 = vmatprep.subr.mxu0 0.0
    %291 = vmatpush1.msra.mxu0 0.0
    %292 = vmatprep.subr.mxu0 0.0
    %293 = vmatpush1.msra.mxu0 0.0
    %294 = vmatprep.subr.mxu0 0.0
    %295 = vmatpush1.msra.mxu0 0.0
    %296 = vmatprep.subr.mxu0 0.0
    %297 = vmatpush1.msra.mxu0 0.0
    %298 = vmatprep.subr.mxu0 0.0
    %299 = vmatpush1.msra.mxu0 0.0
    %300 = vmatprep.subr.mxu0 0.0
    %301 = vmatpush1.msra.mxu0 0.0
    %302 = vmatprep.subr.mxu0 0.0
    %303 = vmatpush1.msra.mxu0 0.0
    %304 = vmatprep.subr.mxu0 0.0
    %305 = vmatpush1.msra.mxu0 0.0
    %306 = vmatprep.subr.mxu0 0.0
    %307 = vmatpush1.msra.mxu0 0.0
    %308 = vmatprep.subr.mxu0 0.0
    %309 = vmatpush1.msra.mxu0 0.0
    %310 = vmatprep.subr.mxu0 0.0
    %311 = vmatpush1.msra.mxu0 0.0
    %312 = vmatprep.subr.mxu0 0.0
    %313 = vmatpush1.msra.mxu0 0.0
    %314 = vmatprep.subr.mxu0 0.0
    %315 = vmatpush1.msra.mxu0 0.0
    %316 = vmatprep.subr.mxu0 0.0
    %317 = vmatpush1.msra.mxu0 0.0
    %318 = vmatprep.subr.mxu0 0.0
    %319 = vmatpush1.msra.mxu0 0.0
    %320 = vmatprep.subr.mxu0 0.0
    %321 = vmatpush1.msra.mxu0 0.0
    %322 = vmatprep.mubr.f32.mxu0 0.0
    %323 = vmatmul.mubr.f32.gmra.mrb[0].mxu0 %v256
    %v324 = vpop.f32.mrb[0].mxu0
    %v325 = vadd.f32 0.0, %v324
    %v326 = vpop.f32.mrb[0].mxu0
    %327 = vdwg.mxu0
    %328 = vmatprep.subr.mxu0 0.0
    %329 = vmatpush1.msra.mxu0 %v62
    %330 = vmatprep.subr.mxu0 0.0
    %331 = vmatpush1.msra.mxu0 %v63
    %332 = vmatprep.subr.mxu0 0.0
    %333 = vmatpush1.msra.mxu0 %v64
    %334 = vmatprep.subr.mxu0 0.0
    %335 = vmatpush1.msra.mxu0 %v65
    %336 = vmatprep.subr.mxu0 0.0
    %337 = vmatpush1.msra.mxu0 %v66
    %338 = vmatprep.subr.mxu0 0.0
    %339 = vmatpush1.msra.mxu0 %v67
    %340 = vmatprep.subr.mxu0 0.0
    %341 = vmatpush1.msra.mxu0 %v68
    %342 = vmatprep.subr.mxu0 0.0
    %343 = vmatpush1.msra.mxu0 %v69
    %344 = vmatprep.subr.mxu0 0.0
    %345 = vmatpush1.msra.mxu0 %v70
    %346 = vmatprep.subr.mxu0 0.0
    %347 = vmatpush1.msra.mxu0 %v71
    %348 = vmatprep.subr.mxu0 0.0
    %349 = vmatpush1.msra.mxu0 %v72
    %350 = vmatprep.subr.mxu0 0.0
    %351 = vmatpush1.msra.mxu0 %v73
    %352 = vmatprep.subr.mxu0 0.0
    %353 = vmatpush1.msra.mxu0 %v74
    %354 = vmatprep.subr.mxu0 0.0
    %355 = vmatpush1.msra.mxu0 %v75
    %356 = vmatprep.subr.mxu0 0.0
    %357 = vmatpush1.msra.mxu0 %v76
    %358 = vmatprep.subr.mxu0 0.0
    %359 = vmatpush1.msra.mxu0 %v77
    %360 = vmatprep.subr.mxu0 0.0
    %361 = vmatpush1.msra.mxu0 0.0
    %362 = vmatprep.subr.mxu0 0.0
    %363 = vmatpush1.msra.mxu0 0.0
    %364 = vmatprep.subr.mxu0 0.0
    %365 = vmatpush1.msra.mxu0 0.0
    %366 = vmatprep.subr.mxu0 0.0
    %367 = vmatpush1.msra.mxu0 0.0
    %368 = vmatprep.subr.mxu0 0.0
    %369 = vmatpush1.msra.mxu0 0.0
    %370 = vmatprep.subr.mxu0 0.0
    %371 = vmatpush1.msra.mxu0 0.0
    %372 = vmatprep.subr.mxu0 0.0
    %373 = vmatpush1.msra.mxu0 0.0
    %374 = vmatprep.subr.mxu0 0.0
    %375 = vmatpush1.msra.mxu0 0.0
    %376 = vmatprep.subr.mxu0 0.0
    %377 = vmatpush1.msra.mxu0 0.0
    %378 = vmatprep.subr.mxu0 0.0
    %379 = vmatpush1.msra.mxu0 0.0
    %380 = vmatprep.subr.mxu0 0.0
    %381 = vmatpush1.msra.mxu0 0.0
    %382 = vmatprep.subr.mxu0 0.0
    %383 = vmatpush1.msra.mxu0 0.0
    %384 = vmatprep.subr.mxu0 0.0
    %385 = vmatpush1.msra.mxu0 0.0
    %386 = vmatprep.subr.mxu0 0.0
    %387 = vmatpush1.msra.mxu0 0.0
    %388 = vmatprep.subr.mxu0 0.0
    %389 = vmatpush1.msra.mxu0 0.0
    %390 = vmatprep.subr.mxu0 0.0
    %391 = vmatpush1.msra.mxu0 0.0
    %392 = vmatprep.mubr.f32.mxu0 0.0
    %393 = vmatmul.mubr.f32.gmra.mrb[0].mxu0 %v257
    %v394 = vpop.f32.mrb[0].mxu0
    %v395 = vadd.f32 0.0, %v394
    %v396 = vpop.f32.mrb[0].mxu0
    %397 = vdwg.mxu0
    %398 = vst [vmem:[#allocation7] sm:$0xff] %v325
    %399 = vst [vmem:[#allocation7 + $0x8] sm:$0xff] %v395
    %400 = vst [vmem:[#allocation8] sm:$0xff] %v256
    %401 = vst [vmem:[#allocation8 + $0x8] sm:$0xff] %v257
    // Predicated region
    $region22: #{tpu_custom_call.1} parent=1 // pred_check
      _
    $region23: #{tpu_custom_call.1} parent=1 // pred_check_branch
      %403 = sbr.rel (0) target = $region25
    $region24: #{tpu_custom_call.1} parent=1 // pred_region
      %s405 = ssub.s32 256, 256
      %406 = vsyncadd [#allocation4], %s405
      %s407 = sshll.u32 [#allocation7], 4
      %s408 = int_to_ptr.vmem [resolvable:$true] %s407
      %413 = dma.vmem_to_hbm [thread:$0]  %s408, 256, %s3, [#allocation4], 128, 128, 8
    $region25: #{tpu_custom_call.1} parent=1 // pred_fallthru
      _
    // Predicated region
    $region26: #{tpu_custom_call.1} parent=1 // pred_check
      _
    $region27: #{tpu_custom_call.1} parent=1 // pred_check_branch
      %415 = sbr.rel (0) target = $region29
    $region28: #{tpu_custom_call.1} parent=1 // pred_region
      %s417 = ssub.s32 256, 256
      %418 = vsyncadd [#allocation9], %s417
      %s419 = sshll.u32 [#allocation8], 4
      %s420 = int_to_ptr.vmem [resolvable:$true] %s419
      %425 = dma.vmem_to_hbm [thread:$0]  %s420, 256, %s4, [#allocation9], 128, 128, 8
    $region29: #{tpu_custom_call.1} parent=1 // pred_fallthru
      _
    // Predicated region
    $region30: #{tpu_custom_call.1} parent=1 // pred_check
      _
    $region31: #{tpu_custom_call.1} parent=1 // pred_check_branch
      %427 = sbr.rel (0) target = $region33
    $region32: #{tpu_custom_call.1} parent=1 // pred_region
      %428 = dma.done [#allocation4], 256
    $region33: #{tpu_custom_call.1} parent=1 // pred_fallthru
      _
    // Predicated region
    $region34: #{tpu_custom_call.1} parent=1 // pred_check
      _
    $region35: #{tpu_custom_call.1} parent=1 // pred_check_branch
      %430 = sbr.rel (0) target = $region37
    $region36: #{tpu_custom_call.1} parent=1 // pred_region
      %431 = dma.done [#allocation9], 256
    $region37: #{tpu_custom_call.1} parent=1 // pred_fallthru
      _
    %432 = vsyncpa [#allocation3], 1
    %433 = vsyncpa [#allocation6], 1
    %434 = vsyncpa [#allocation4], 1
    %435 = vsyncpa [#allocation9], 1

</llo_original>
